<compile_context>
chip_gen: v7x
topology: tpu7x:2x2x1
jax: 0.10.0
libtpu: 0.0.40
codegen_flags: <defaults>
</compile_context>

<pallas_src>
import functools

import jax
import jax.numpy as jnp
from jax import lax
from jax.experimental import pallas as pl
from jax.experimental.pallas import tpu as pltpu

KSIZE = 7
PAD = KSIZE // 2   # = 3, matches the PyTorch module (padding = 7 // 2)


def _round_up(x, m):
    return (x + m - 1) // m * m


def _spatial_attn_kernel(w_ref, col_ref, x_ref, o_ref, pad_ref, *,
                         C, W, HW, CK, OFFA, L, HOIST):
    """One batch element per grid step.

    w_ref   : SMEM (49,) f32       flattened 7x7 conv weight
    col_ref : VMEM (1, HW) i32     column index (i % W) of each flattened pixel
    x_ref   : VMEM (1, C, HW)      input slab (lane-dense layout)
    o_ref   : VMEM (1, C, HW)      output slab
    pad_ref : VMEM (1, L) f32      zero-bordered flattened pooled map
    """
    n_full = C // CK
    rem = C - n_full * CK

    # ---- 1) fused max+mean channel pooling, streamed in C-chunks -----------
    mdt = x_ref.dtype if jnp.issubdtype(x_ref.dtype, jnp.floating) else jnp.float32
    if HOIST and n_full > 0:
        # Elementwise accumulators (VPU only inside the loop); the cross-sublane
        # reductions happen exactly once below, off the HBM-bound stream.
        def pool_body(i, carry):
            m, s = carry
            c0 = pl.multiple_of(i * CK, CK)
            xc = x_ref[0, pl.ds(c0, CK), :]
            return jnp.maximum(m, xc.astype(mdt)), s + xc.astype(jnp.float32)

        m, s = lax.fori_loop(
            0, n_full, pool_body,
            (jnp.full((CK, HW), -jnp.inf, dtype=mdt),
             jnp.zeros((CK, HW), dtype=jnp.float32)),
            unroll=n_full <= 8)
        mx = jnp.max(m, axis=0, keepdims=True).astype(jnp.float32)
        sm = jnp.sum(s, axis=0, keepdims=True)
    elif n_full > 0:
        # Chunk too large to keep elementwise accumulators live in vregs.
        def pool_body(i, carry):
            m, s = carry
            c0 = pl.multiple_of(i * CK, CK)
            xc = x_ref[0, pl.ds(c0, CK), :].astype(jnp.float32)
            return (jnp.maximum(m, jnp.max(xc, axis=0, keepdims=True)),
                    s + jnp.sum(xc, axis=0, keepdims=True))

        mx, sm = lax.fori_loop(
            0, n_full, pool_body,
            (jnp.full((1, HW), -jnp.inf, dtype=jnp.float32),
             jnp.zeros((1, HW), dtype=jnp.float32)))
    else:
        mx = jnp.full((1, HW), -jnp.inf, dtype=jnp.float32)
        sm = jnp.zeros((1, HW), dtype=jnp.float32)
    if rem:
        xc = x_ref[0, n_full * CK:C, :].astype(jnp.float32)
        mx = jnp.maximum(mx, jnp.max(xc, axis=0, keepdims=True))
        sm = sm + jnp.sum(xc, axis=0, keepdims=True)
    pool = mx + sm * (1.0 / C)                                       # (1, HW) f32

    # ---- 2) pooled map -> zero-bordered flat scratch ------------------------
    # One aligned interior store + two small border zero-stores.  Re-zeroed
    # every step so correctness never depends on megacore core assignment.
    pad_ref[:, 0:OFFA] = jnp.zeros((1, OFFA), dtype=jnp.float32)
    pad_ref[:, OFFA + HW:L] = jnp.zeros((1, L - OFFA - HW), dtype=jnp.float32)
    pad_ref[:, OFFA:OFFA + HW] = pool

    # ---- 3) 7x7 "same" conv directly in the flattened layout ---------------
    # Tap (dy,dx) is a static lane-offset load of HW elements; rows that fall
    # outside [0,H) read the zero border, columns that wrap into the adjacent
    # image row are killed by the per-dx column mask (applied once per dx).
    col = col_ref[...]                                               # (1, HW) i32
    acc = jnp.zeros((1, HW), dtype=jnp.float32)
    for dx in range(KSIZE):
        sub = None
        for dy in range(KSIZE):
            off = OFFA + (dy - PAD) * W + (dx - PAD)
            t = pad_ref[:, off:off + HW] * w_ref[dy * KSIZE + dx]
            sub = t if sub is None else sub + t
        lo = PAD - dx
        mask = (col >= lo) & (col < W + lo)
        acc = acc + jnp.where(mask, sub, 0.0)
    attn = jax.nn.sigmoid(acc)                                       # (1, HW) f32

    # ---- 4) broadcast multiply in native dtype, lane-dense stores ----------
    attn_x = attn.astype(o_ref.dtype)
    if n_full:
        attn_b = jnp.broadcast_to(attn_x, (CK, HW))   # hoisted out of the loop

        def mul_body(i, carry):
            c0 = pl.multiple_of(i * CK, CK)
            o_ref[0, pl.ds(c0, CK), :] = attn_b * x_ref[0, pl.ds(c0, CK), :]
            return carry

        lax.fori_loop(0, n_full, mul_body, 0, unroll=n_full <= 8)
    if rem:
        o_ref[0, n_full * CK:C, :] = attn_x * x_ref[0, n_full * CK:C, :]


def spatial_attention(x, conv_weight):
    """x: (B, C, H, W); conv_weight: (1, 1, 7, 7). Returns sigmoid(conv(max+avg)) * x."""
    B, C, H, W = x.shape
    HW = H * W
    # Lane-dense view: NCHW is contiguous over (H, W), so this reshape is free.
    # TODO(synk): if x can arrive with permuted strides, materialise NCHW first.
    x_flat = x.reshape(B, C, HW)
    w_flat = conv_weight.reshape(-1).astype(jnp.float32)             # (49,)
    col_idx = (jnp.arange(HW, dtype=jnp.int32) % W)[None, :]         # (1, HW) i32

    itemsize = jnp.dtype(x.dtype).itemsize
    sub_tile = max(8, 32 // itemsize)    # full packed sublane tile: 8 f32 / 16 bf16 / 32 i8
    HW_al = _round_up(HW, 128)

    # Channel chunk: at least one packed sublane tile, scaled so each fori_loop
    # iteration moves >= ~32 KiB when the spatial map is small.
    ck = max(sub_tile, (32 * 1024) // max(1, HW_al * itemsize))
    ck = (ck // sub_tile) * sub_tile
    CK = min(C, ck)
    # Keep elementwise pooling accumulators only while chunk + 2 accs fit in vregs.
    hoist = 3 * CK * HW_al * 4 <= 48 * 4096

    # Flattened, zero-bordered conv-scratch geometry.
    OFF = PAD * W + PAD                      # max |tap offset|
    OFFA = _round_up(OFF, 128)               # aligned interior start
    L = _round_up(OFFA + HW + OFF, 128)      # total scratch length

    kernel = functools.partial(_spatial_attn_kernel, C=C, W=W, HW=HW, CK=CK,
                               OFFA=OFFA, L=L, HOIST=hoist)

    # VMEM budget from PADDED tile sizes (double-buffered in + out, plus scratch
    # and the column-index map), capped by the queried device VMEM capacity.
    C_al = _round_up(C, sub_tile)
    block_bytes = C_al * HW_al * itemsize
    scratch_bytes = 8 * L * 4 + 2 * 8 * HW_al * 4
    want = 4 * block_bytes + scratch_bytes + (2 << 20)
    try:
        cap_phys = int(getattr(pltpu.get_tpu_info(), "vmem_capacity_bytes",
                               128 * 1024 * 1024))
    except Exception:
        cap_phys = 64 * 1024 * 1024          # conservative (v7x-safe) fallback
    vmem_limit = int(min(int(cap_phys * 0.85), max(32 * 1024 * 1024, want)))

    out_flat = pl.pallas_call(
        kernel,
        out_shape=jax.ShapeDtypeStruct((B, C, HW), x.dtype),
        grid_spec=pltpu.PrefetchScalarGridSpec(
            num_scalar_prefetch=0,
            grid=(B,),
            in_specs=[
                pl.BlockSpec(memory_space=pltpu.SMEM),               # conv weights
                pl.BlockSpec((1, HW), lambda b: (0, 0)),             # column-index map
                pl.BlockSpec((1, C, HW), lambda b: (b, 0, 0)),       # x slab
            ],
            out_specs=pl.BlockSpec((1, C, HW), lambda b: (b, 0, 0)),
            scratch_shapes=[pltpu.VMEM((1, L), jnp.float32)],
        ),
        compiler_params=pltpu.CompilerParams(
            dimension_semantics=("parallel",),
            vmem_limit_bytes=vmem_limit),
    )(w_flat, col_idx, x_flat)
    return out_flat.reshape(B, C, H, W)


def _reference(x, conv_weight):
    """Pure-JAX reference mirroring the PyTorch forward."""
    max_pool = jnp.max(x, axis=1, keepdims=True)
    avg_pool = jnp.mean(x, axis=1, keepdims=True)
    pool = max_pool + avg_pool                                       # (B,1,H,W)
    out = lax.conv_general_dilated(
        pool, conv_weight, window_strides=(1, 1),
        padding=[(PAD, PAD), (PAD, PAD)],
        dimension_numbers=("NCHW", "OIHW", "NCHW"))
    return jax.nn.sigmoid(out) * x


if __name__ == "__main__":
    key = jax.random.PRNGKey(0)
    kx, kw = jax.random.split(key)

    B, C, H, W = 2, 4, 16, 16
    x = jax.random.normal(kx, (B, C, H, W), dtype=jnp.float32)
    # Deterministic conv weight (shape (1,1,7,7), no bias), kaiming-like scale.
    bound = 1.0 / (KSIZE * KSIZE) ** 0.5
    conv_weight = jax.random.uniform(
        kw, (1, 1, KSIZE, KSIZE), minval=-bound, maxval=bound, dtype=jnp.float32)

    out = spatial_attention(x, conv_weight)
    out = jax.block_until_ready(out)

    ref = _reference(x, conv_weight)
    assert out.shape == (B, C, H, W)
    assert jnp.allclose(out, ref, atol=2e-5, rtol=2e-5), "mismatch vs reference"

    print("KERNEL_OK")
</pallas_src>

<mosaic_0001>
module attributes {stable_mosaic.version = 11 : i64} {
  func.func @_spatial_attn_kernel(%arg0: i32, %arg1: memref<49xf32, #tpu.memory_space<smem>>, %arg2: memref<1x256xi32, #tpu.memory_space<vmem>>, %arg3: memref<1x4x256xf32, #tpu.memory_space<vmem>>, %arg4: memref<1x4x256xf32, #tpu.memory_space<vmem>>, %arg5: memref<1x512xf32, #tpu.memory_space<vmem>>) attributes {dimension_semantics = [#tpu.dimension_semantics<parallel>], iteration_bounds = array<i64: 2>, scalar_prefetch = 0 : i64, scratch_operands = 1 : i64, tpu.core_type = #tpu.core_type<tc>, window_params = [{transform_indices = @transform_0, window_bounds = array<i64: 49>}, {pipeline_mode = #tpu.pipeline_mode<synchronous>, transform_indices = @transform_1, window_bounds = array<i64: 1, 256>}, {transform_indices = @transform_2, window_bounds = array<i64: 1, 4, 256>}, {transform_indices = @transform_3, window_bounds = array<i64: 1, 4, 256>}]} {
    %cst = arith.constant 0xFF800000 : f32
    %0 = vector.broadcast %cst : f32 to vector<4x256xf32>
    %cst_0 = arith.constant 0.000000e+00 : f32
    %1 = vector.broadcast %cst_0 : f32 to vector<4x256xf32>
    %c0_i32 = arith.constant 0 : i32
    %c4_i32 = arith.constant 4 : i32
    %2 = arith.muli %c0_i32, %c4_i32 : i32
    %3 = tpu.assume_multiple %2, 4 : i32
    %c0 = arith.constant 0 : index
    %4 = arith.index_cast %3 : i32 to index
    %c0_1 = arith.constant 0 : index
    %5 = vector.load %arg3[%c0, %4, %c0_1] : memref<1x4x256xf32, #tpu.memory_space<vmem>>, vector<1x4x256xf32>
    %6 = vector.shape_cast %5 : vector<1x4x256xf32> to vector<4x256xf32>
    %7 = arith.maximumf %0, %6 : vector<4x256xf32>
    %8 = arith.addf %1, %6 : vector<4x256xf32>
    %c1_i32 = arith.constant 1 : i32
    %cst_2 = arith.constant dense<0xFF800000> : vector<256xf32>
    %9 = vector.multi_reduction <maximumf>, %7, %cst_2 [0] : vector<4x256xf32> to vector<256xf32>
    %10 = vector.shape_cast %9 : vector<256xf32> to vector<1x256xf32>
    %cst_3 = arith.constant dense<0.000000e+00> : vector<256xf32>
    %11 = vector.multi_reduction <add>, %8, %cst_3 [0] : vector<4x256xf32> to vector<256xf32>
    %12 = vector.shape_cast %11 : vector<256xf32> to vector<1x256xf32>
    %cst_4 = arith.constant 2.500000e-01 : f32
    %13 = vector.broadcast %cst_4 : f32 to vector<1x256xf32>
    %14 = arith.mulf %12, %13 : vector<1x256xf32>
    %15 = arith.addf %10, %14 : vector<1x256xf32>
    %cst_5 = arith.constant 0.000000e+00 : f32
    %16 = vector.broadcast %cst_5 : f32 to vector<1x128xf32>
    %c0_6 = arith.constant 0 : index
    %c0_7 = arith.constant 0 : index
    %17 = vector.load %arg5[%c0_6, %c0_7] : memref<1x512xf32, #tpu.memory_space<vmem>>, vector<1x128xf32>
    tpu.vector_store %arg5[%c0_6, %c0_7], %16 {strides = array<i32>} : memref<1x512xf32, #tpu.memory_space<vmem>>, vector<1x128xf32>,
    %cst_8 = arith.constant 0.000000e+00 : f32
    %18 = vector.broadcast %cst_8 : f32 to vector<1x128xf32>
    %c0_9 = arith.constant 0 : index
    %c384 = arith.constant 384 : index
    %19 = vector.load %arg5[%c0_9, %c384] : memref<1x512xf32, #tpu.memory_space<vmem>>, vector<1x128xf32>
    tpu.vector_store %arg5[%c0_9, %c384], %18 {strides = array<i32>} : memref<1x512xf32, #tpu.memory_space<vmem>>, vector<1x128xf32>,
    %c0_10 = arith.constant 0 : index
    %c128 = arith.constant 128 : index
    %20 = vector.load %arg5[%c0_10, %c128] : memref<1x512xf32, #tpu.memory_space<vmem>>, vector<1x256xf32>
    tpu.vector_store %arg5[%c0_10, %c128], %15 {strides = array<i32>} : memref<1x512xf32, #tpu.memory_space<vmem>>, vector<1x256xf32>,
    %c0_11 = arith.constant 0 : index
    %c0_12 = arith.constant 0 : index
    %21 = vector.load %arg2[%c0_11, %c0_12] : memref<1x256xi32, #tpu.memory_space<vmem>>, vector<1x256xi32>
    %cst_13 = arith.constant 0.000000e+00 : f32
    %22 = vector.broadcast %cst_13 : f32 to vector<1x256xf32>
    %c0_14 = arith.constant 0 : index
    %c77 = arith.constant 77 : index
    %23 = vector.load %arg5[%c0_14, %c77] : memref<1x512xf32, #tpu.memory_space<vmem>>, vector<1x256xf32>
    %c0_15 = arith.constant 0 : index
    %24 = memref.load %arg1[%c0_15] : memref<49xf32, #tpu.memory_space<smem>>
    %25 = vector.broadcast %24 : f32 to vector<1x256xf32>
    %26 = arith.mulf %23, %25 : vector<1x256xf32>
    %c0_16 = arith.constant 0 : index
    %c93 = arith.constant 93 : index
    %27 = vector.load %arg5[%c0_16, %c93] : memref<1x512xf32, #tpu.memory_space<vmem>>, vector<1x256xf32>
    %c7 = arith.constant 7 : index
    %28 = memref.load %arg1[%c7] : memref<49xf32, #tpu.memory_space<smem>>
    %29 = vector.broadcast %28 : f32 to vector<1x256xf32>
    %30 = arith.mulf %27, %29 : vector<1x256xf32>
    %31 = arith.addf %26, %30 : vector<1x256xf32>
    %c0_17 = arith.constant 0 : index
    %c109 = arith.constant 109 : index
    %32 = vector.load %arg5[%c0_17, %c109] : memref<1x512xf32, #tpu.memory_space<vmem>>, vector<1x256xf32>
    %c14 = arith.constant 14 : index
    %33 = memref.load %arg1[%c14] : memref<49xf32, #tpu.memory_space<smem>>
    %34 = vector.broadcast %33 : f32 to vector<1x256xf32>
    %35 = arith.mulf %32, %34 : vector<1x256xf32>
    %36 = arith.addf %31, %35 : vector<1x256xf32>
    %c0_18 = arith.constant 0 : index
    %c125 = arith.constant 125 : index
    %37 = vector.load %arg5[%c0_18, %c125] : memref<1x512xf32, #tpu.memory_space<vmem>>, vector<1x256xf32>
    %c21 = arith.constant 21 : index
    %38 = memref.load %arg1[%c21] : memref<49xf32, #tpu.memory_space<smem>>
    %39 = vector.broadcast %38 : f32 to vector<1x256xf32>
    %40 = arith.mulf %37, %39 : vector<1x256xf32>
    %41 = arith.addf %36, %40 : vector<1x256xf32>
    %c0_19 = arith.constant 0 : index
    %c141 = arith.constant 141 : index
    %42 = vector.load %arg5[%c0_19, %c141] : memref<1x512xf32, #tpu.memory_space<vmem>>, vector<1x256xf32>
    %c28 = arith.constant 28 : index
    %43 = memref.load %arg1[%c28] : memref<49xf32, #tpu.memory_space<smem>>
    %44 = vector.broadcast %43 : f32 to vector<1x256xf32>
    %45 = arith.mulf %42, %44 : vector<1x256xf32>
    %46 = arith.addf %41, %45 : vector<1x256xf32>
    %c0_20 = arith.constant 0 : index
    %c157 = arith.constant 157 : index
    %47 = vector.load %arg5[%c0_20, %c157] : memref<1x512xf32, #tpu.memory_space<vmem>>, vector<1x256xf32>
    %c35 = arith.constant 35 : index
    %48 = memref.load %arg1[%c35] : memref<49xf32, #tpu.memory_space<smem>>
    %49 = vector.broadcast %48 : f32 to vector<1x256xf32>
    %50 = arith.mulf %47, %49 : vector<1x256xf32>
    %51 = arith.addf %46, %50 : vector<1x256xf32>
    %c0_21 = arith.constant 0 : index
    %c173 = arith.constant 173 : index
    %52 = vector.load %arg5[%c0_21, %c173] : memref<1x512xf32, #tpu.memory_space<vmem>>, vector<1x256xf32>
    %c42 = arith.constant 42 : index
    %53 = memref.load %arg1[%c42] : memref<49xf32, #tpu.memory_space<smem>>
    %54 = vector.broadcast %53 : f32 to vector<1x256xf32>
    %55 = arith.mulf %52, %54 : vector<1x256xf32>
    %56 = arith.addf %51, %55 : vector<1x256xf32>
    %c3_i32 = arith.constant 3 : i32
    %57 = vector.broadcast %c3_i32 : i32 to vector<1x256xi32>
    %58 = arith.cmpi sge, %21, %57 : vector<1x256xi32>
    %c19_i32 = arith.constant 19 : i32
    %59 = vector.broadcast %c19_i32 : i32 to vector<1x256xi32>
    %60 = arith.cmpi slt, %21, %59 : vector<1x256xi32>
    %61 = arith.andi %58, %60 : vector<1x256xi1>
    %cst_22 = arith.constant 0.000000e+00 : f32
    %62 = vector.broadcast %cst_22 : f32 to vector<1x256xf32>
    %63 = arith.select %61, %56, %62 : vector<1x256xi1>, vector<1x256xf32>
    %64 = arith.addf %22, %63 : vector<1x256xf32>
    %c0_23 = arith.constant 0 : index
    %c78 = arith.constant 78 : index
    %65 = vector.load %arg5[%c0_23, %c78] : memref<1x512xf32, #tpu.memory_space<vmem>>, vector<1x256xf32>
    %c1 = arith.constant 1 : index
    %66 = memref.load %arg1[%c1] : memref<49xf32, #tpu.memory_space<smem>>
    %67 = vector.broadcast %66 : f32 to vector<1x256xf32>
    %68 = arith.mulf %65, %67 : vector<1x256xf32>
    %c0_24 = arith.constant 0 : index
    %c94 = arith.constant 94 : index
    %69 = vector.load %arg5[%c0_24, %c94] : memref<1x512xf32, #tpu.memory_space<vmem>>, vector<1x256xf32>
    %c8 = arith.constant 8 : index
    %70 = memref.load %arg1[%c8] : memref<49xf32, #tpu.memory_space<smem>>
    %71 = vector.broadcast %70 : f32 to vector<1x256xf32>
    %72 = arith.mulf %69, %71 : vector<1x256xf32>
    %73 = arith.addf %68, %72 : vector<1x256xf32>
    %c0_25 = arith.constant 0 : index
    %c110 = arith.constant 110 : index
    %74 = vector.load %arg5[%c0_25, %c110] : memref<1x512xf32, #tpu.memory_space<vmem>>, vector<1x256xf32>
    %c15 = arith.constant 15 : index
    %75 = memref.load %arg1[%c15] : memref<49xf32, #tpu.memory_space<smem>>
    %76 = vector.broadcast %75 : f32 to vector<1x256xf32>
    %77 = arith.mulf %74, %76 : vector<1x256xf32>
    %78 = arith.addf %73, %77 : vector<1x256xf32>
    %c0_26 = arith.constant 0 : index
    %c126 = arith.constant 126 : index
    %79 = vector.load %arg5[%c0_26, %c126] : memref<1x512xf32, #tpu.memory_space<vmem>>, vector<1x256xf32>
    %c22 = arith.constant 22 : index
    %80 = memref.load %arg1[%c22] : memref<49xf32, #tpu.memory_space<smem>>
    %81 = vector.broadcast %80 : f32 to vector<1x256xf32>
    %82 = arith.mulf %79, %81 : vector<1x256xf32>
    %83 = arith.addf %78, %82 : vector<1x256xf32>
    %c0_27 = arith.constant 0 : index
    %c142 = arith.constant 142 : index
    %84 = vector.load %arg5[%c0_27, %c142] : memref<1x512xf32, #tpu.memory_space<vmem>>, vector<1x256xf32>
    %c29 = arith.constant 29 : index
    %85 = memref.load %arg1[%c29] : memref<49xf32, #tpu.memory_space<smem>>
    %86 = vector.broadcast %85 : f32 to vector<1x256xf32>
    %87 = arith.mulf %84, %86 : vector<1x256xf32>
    %88 = arith.addf %83, %87 : vector<1x256xf32>
    %c0_28 = arith.constant 0 : index
    %c158 = arith.constant 158 : index
    %89 = vector.load %arg5[%c0_28, %c158] : memref<1x512xf32, #tpu.memory_space<vmem>>, vector<1x256xf32>
    %c36 = arith.constant 36 : index
    %90 = memref.load %arg1[%c36] : memref<49xf32, #tpu.memory_space<smem>>
    %91 = vector.broadcast %90 : f32 to vector<1x256xf32>
    %92 = arith.mulf %89, %91 : vector<1x256xf32>
    %93 = arith.addf %88, %92 : vector<1x256xf32>
    %c0_29 = arith.constant 0 : index
    %c174 = arith.constant 174 : index
    %94 = vector.load %arg5[%c0_29, %c174] : memref<1x512xf32, #tpu.memory_space<vmem>>, vector<1x256xf32>
    %c43 = arith.constant 43 : index
    %95 = memref.load %arg1[%c43] : memref<49xf32, #tpu.memory_space<smem>>
    %96 = vector.broadcast %95 : f32 to vector<1x256xf32>
    %97 = arith.mulf %94, %96 : vector<1x256xf32>
    %98 = arith.addf %93, %97 : vector<1x256xf32>
    %c2_i32 = arith.constant 2 : i32
    %99 = vector.broadcast %c2_i32 : i32 to vector<1x256xi32>
    %100 = arith.cmpi sge, %21, %99 : vector<1x256xi32>
    %c18_i32 = arith.constant 18 : i32
    %101 = vector.broadcast %c18_i32 : i32 to vector<1x256xi32>
    %102 = arith.cmpi slt, %21, %101 : vector<1x256xi32>
    %103 = arith.andi %100, %102 : vector<1x256xi1>
    %cst_30 = arith.constant 0.000000e+00 : f32
    %104 = vector.broadcast %cst_30 : f32 to vector<1x256xf32>
    %105 = arith.select %103, %98, %104 : vector<1x256xi1>, vector<1x256xf32>
    %106 = arith.addf %64, %105 : vector<1x256xf32>
    %c0_31 = arith.constant 0 : index
    %c79 = arith.constant 79 : index
    %107 = vector.load %arg5[%c0_31, %c79] : memref<1x512xf32, #tpu.memory_space<vmem>>, vector<1x256xf32>
    %c2 = arith.constant 2 : index
    %108 = memref.load %arg1[%c2] : memref<49xf32, #tpu.memory_space<smem>>
    %109 = vector.broadcast %108 : f32 to vector<1x256xf32>
    %110 = arith.mulf %107, %109 : vector<1x256xf32>
    %c0_32 = arith.constant 0 : index
    %c95 = arith.constant 95 : index
    %111 = vector.load %arg5[%c0_32, %c95] : memref<1x512xf32, #tpu.memory_space<vmem>>, vector<1x256xf32>
    %c9 = arith.constant 9 : index
    %112 = memref.load %arg1[%c9] : memref<49xf32, #tpu.memory_space<smem>>
    %113 = vector.broadcast %112 : f32 to vector<1x256xf32>
    %114 = arith.mulf %111, %113 : vector<1x256xf32>
    %115 = arith.addf %110, %114 : vector<1x256xf32>
    %c0_33 = arith.constant 0 : index
    %c111 = arith.constant 111 : index
    %116 = vector.load %arg5[%c0_33, %c111] : memref<1x512xf32, #tpu.memory_space<vmem>>, vector<1x256xf32>
    %c16 = arith.constant 16 : index
    %117 = memref.load %arg1[%c16] : memref<49xf32, #tpu.memory_space<smem>>
    %118 = vector.broadcast %117 : f32 to vector<1x256xf32>
    %119 = arith.mulf %116, %118 : vector<1x256xf32>
    %120 = arith.addf %115, %119 : vector<1x256xf32>
    %c0_34 = arith.constant 0 : index
    %c127 = arith.constant 127 : index
    %121 = vector.load %arg5[%c0_34, %c127] : memref<1x512xf32, #tpu.memory_space<vmem>>, vector<1x256xf32>
    %c23 = arith.constant 23 : index
    %122 = memref.load %arg1[%c23] : memref<49xf32, #tpu.memory_space<smem>>
    %123 = vector.broadcast %122 : f32 to vector<1x256xf32>
    %124 = arith.mulf %121, %123 : vector<1x256xf32>
    %125 = arith.addf %120, %124 : vector<1x256xf32>
    %c0_35 = arith.constant 0 : index
    %c143 = arith.constant 143 : index
    %126 = vector.load %arg5[%c0_35, %c143] : memref<1x512xf32, #tpu.memory_space<vmem>>, vector<1x256xf32>
    %c30 = arith.constant 30 : index
    %127 = memref.load %arg1[%c30] : memref<49xf32, #tpu.memory_space<smem>>
    %128 = vector.broadcast %127 : f32 to vector<1x256xf32>
    %129 = arith.mulf %126, %128 : vector<1x256xf32>
    %130 = arith.addf %125, %129 : vector<1x256xf32>
    %c0_36 = arith.constant 0 : index
    %c159 = arith.constant 159 : index
    %131 = vector.load %arg5[%c0_36, %c159] : memref<1x512xf32, #tpu.memory_space<vmem>>, vector<1x256xf32>
    %c37 = arith.constant 37 : index
    %132 = memref.load %arg1[%c37] : memref<49xf32, #tpu.memory_space<smem>>
    %133 = vector.broadcast %132 : f32 to vector<1x256xf32>
    %134 = arith.mulf %131, %133 : vector<1x256xf32>
    %135 = arith.addf %130, %134 : vector<1x256xf32>
    %c0_37 = arith.constant 0 : index
    %c175 = arith.constant 175 : index
    %136 = vector.load %arg5[%c0_37, %c175] : memref<1x512xf32, #tpu.memory_space<vmem>>, vector<1x256xf32>
    %c44 = arith.constant 44 : index
    %137 = memref.load %arg1[%c44] : memref<49xf32, #tpu.memory_space<smem>>
    %138 = vector.broadcast %137 : f32 to vector<1x256xf32>
    %139 = arith.mulf %136, %138 : vector<1x256xf32>
    %140 = arith.addf %135, %139 : vector<1x256xf32>
    %c1_i32_38 = arith.constant 1 : i32
    %141 = vector.broadcast %c1_i32_38 : i32 to vector<1x256xi32>
    %142 = arith.cmpi sge, %21, %141 : vector<1x256xi32>
    %c17_i32 = arith.constant 17 : i32
    %143 = vector.broadcast %c17_i32 : i32 to vector<1x256xi32>
    %144 = arith.cmpi slt, %21, %143 : vector<1x256xi32>
    %145 = arith.andi %142, %144 : vector<1x256xi1>
    %cst_39 = arith.constant 0.000000e+00 : f32
    %146 = vector.broadcast %cst_39 : f32 to vector<1x256xf32>
    %147 = arith.select %145, %140, %146 : vector<1x256xi1>, vector<1x256xf32>
    %148 = arith.addf %106, %147 : vector<1x256xf32>
    %c0_40 = arith.constant 0 : index
    %c80 = arith.constant 80 : index
    %149 = vector.load %arg5[%c0_40, %c80] : memref<1x512xf32, #tpu.memory_space<vmem>>, vector<1x256xf32>
    %c3 = arith.constant 3 : index
    %150 = memref.load %arg1[%c3] : memref<49xf32, #tpu.memory_space<smem>>
    %151 = vector.broadcast %150 : f32 to vector<1x256xf32>
    %152 = arith.mulf %149, %151 : vector<1x256xf32>
    %c0_41 = arith.constant 0 : index
    %c96 = arith.constant 96 : index
    %153 = vector.load %arg5[%c0_41, %c96] : memref<1x512xf32, #tpu.memory_space<vmem>>, vector<1x256xf32>
    %c10 = arith.constant 10 : index
    %154 = memref.load %arg1[%c10] : memref<49xf32, #tpu.memory_space<smem>>
    %155 = vector.broadcast %154 : f32 to vector<1x256xf32>
    %156 = arith.mulf %153, %155 : vector<1x256xf32>
    %157 = arith.addf %152, %156 : vector<1x256xf32>
    %c0_42 = arith.constant 0 : index
    %c112 = arith.constant 112 : index
    %158 = vector.load %arg5[%c0_42, %c112] : memref<1x512xf32, #tpu.memory_space<vmem>>, vector<1x256xf32>
    %c17 = arith.constant 17 : index
    %159 = memref.load %arg1[%c17] : memref<49xf32, #tpu.memory_space<smem>>
    %160 = vector.broadcast %159 : f32 to vector<1x256xf32>
    %161 = arith.mulf %158, %160 : vector<1x256xf32>
    %162 = arith.addf %157, %161 : vector<1x256xf32>
    %c0_43 = arith.constant 0 : index
    %c128_44 = arith.constant 128 : index
    %163 = vector.load %arg5[%c0_43, %c128_44] : memref<1x512xf32, #tpu.memory_space<vmem>>, vector<1x256xf32>
    %c24 = arith.constant 24 : index
    %164 = memref.load %arg1[%c24] : memref<49xf32, #tpu.memory_space<smem>>
    %165 = vector.broadcast %164 : f32 to vector<1x256xf32>
    %166 = arith.mulf %163, %165 : vector<1x256xf32>
    %167 = arith.addf %162, %166 : vector<1x256xf32>
    %c0_45 = arith.constant 0 : index
    %c144 = arith.constant 144 : index
    %168 = vector.load %arg5[%c0_45, %c144] : memref<1x512xf32, #tpu.memory_space<vmem>>, vector<1x256xf32>
    %c31 = arith.constant 31 : index
    %169 = memref.load %arg1[%c31] : memref<49xf32, #tpu.memory_space<smem>>
    %170 = vector.broadcast %169 : f32 to vector<1x256xf32>
    %171 = arith.mulf %168, %170 : vector<1x256xf32>
    %172 = arith.addf %167, %171 : vector<1x256xf32>
    %c0_46 = arith.constant 0 : index
    %c160 = arith.constant 160 : index
    %173 = vector.load %arg5[%c0_46, %c160] : memref<1x512xf32, #tpu.memory_space<vmem>>, vector<1x256xf32>
    %c38 = arith.constant 38 : index
    %174 = memref.load %arg1[%c38] : memref<49xf32, #tpu.memory_space<smem>>
    %175 = vector.broadcast %174 : f32 to vector<1x256xf32>
    %176 = arith.mulf %173, %175 : vector<1x256xf32>
    %177 = arith.addf %172, %176 : vector<1x256xf32>
    %c0_47 = arith.constant 0 : index
    %c176 = arith.constant 176 : index
    %178 = vector.load %arg5[%c0_47, %c176] : memref<1x512xf32, #tpu.memory_space<vmem>>, vector<1x256xf32>
    %c45 = arith.constant 45 : index
    %179 = memref.load %arg1[%c45] : memref<49xf32, #tpu.memory_space<smem>>
    %180 = vector.broadcast %179 : f32 to vector<1x256xf32>
    %181 = arith.mulf %178, %180 : vector<1x256xf32>
    %182 = arith.addf %177, %181 : vector<1x256xf32>
    %c0_i32_48 = arith.constant 0 : i32
    %183 = vector.broadcast %c0_i32_48 : i32 to vector<1x256xi32>
    %184 = arith.cmpi sge, %21, %183 : vector<1x256xi32>
    %c16_i32 = arith.constant 16 : i32
    %185 = vector.broadcast %c16_i32 : i32 to vector<1x256xi32>
    %186 = arith.cmpi slt, %21, %185 : vector<1x256xi32>
    %187 = arith.andi %184, %186 : vector<1x256xi1>
    %cst_49 = arith.constant 0.000000e+00 : f32
    %188 = vector.broadcast %cst_49 : f32 to vector<1x256xf32>
    %189 = arith.select %187, %182, %188 : vector<1x256xi1>, vector<1x256xf32>
    %190 = arith.addf %148, %189 : vector<1x256xf32>
    %c0_50 = arith.constant 0 : index
    %c81 = arith.constant 81 : index
    %191 = vector.load %arg5[%c0_50, %c81] : memref<1x512xf32, #tpu.memory_space<vmem>>, vector<1x256xf32>
    %c4 = arith.constant 4 : index
    %192 = memref.load %arg1[%c4] : memref<49xf32, #tpu.memory_space<smem>>
    %193 = vector.broadcast %192 : f32 to vector<1x256xf32>
    %194 = arith.mulf %191, %193 : vector<1x256xf32>
    %c0_51 = arith.constant 0 : index
    %c97 = arith.constant 97 : index
    %195 = vector.load %arg5[%c0_51, %c97] : memref<1x512xf32, #tpu.memory_space<vmem>>, vector<1x256xf32>
    %c11 = arith.constant 11 : index
    %196 = memref.load %arg1[%c11] : memref<49xf32, #tpu.memory_space<smem>>
    %197 = vector.broadcast %196 : f32 to vector<1x256xf32>
    %198 = arith.mulf %195, %197 : vector<1x256xf32>
    %199 = arith.addf %194, %198 : vector<1x256xf32>
    %c0_52 = arith.constant 0 : index
    %c113 = arith.constant 113 : index
    %200 = vector.load %arg5[%c0_52, %c113] : memref<1x512xf32, #tpu.memory_space<vmem>>, vector<1x256xf32>
    %c18 = arith.constant 18 : index
    %201 = memref.load %arg1[%c18] : memref<49xf32, #tpu.memory_space<smem>>
    %202 = vector.broadcast %201 : f32 to vector<1x256xf32>
    %203 = arith.mulf %200, %202 : vector<1x256xf32>
    %204 = arith.addf %199, %203 : vector<1x256xf32>
    %c0_53 = arith.constant 0 : index
    %c129 = arith.constant 129 : index
    %205 = vector.load %arg5[%c0_53, %c129] : memref<1x512xf32, #tpu.memory_space<vmem>>, vector<1x256xf32>
    %c25 = arith.constant 25 : index
    %206 = memref.load %arg1[%c25] : memref<49xf32, #tpu.memory_space<smem>>
    %207 = vector.broadcast %206 : f32 to vector<1x256xf32>
    %208 = arith.mulf %205, %207 : vector<1x256xf32>
    %209 = arith.addf %204, %208 : vector<1x256xf32>
    %c0_54 = arith.constant 0 : index
    %c145 = arith.constant 145 : index
    %210 = vector.load %arg5[%c0_54, %c145] : memref<1x512xf32, #tpu.memory_space<vmem>>, vector<1x256xf32>
    %c32 = arith.constant 32 : index
    %211 = memref.load %arg1[%c32] : memref<49xf32, #tpu.memory_space<smem>>
    %212 = vector.broadcast %211 : f32 to vector<1x256xf32>
    %213 = arith.mulf %210, %212 : vector<1x256xf32>
    %214 = arith.addf %209, %213 : vector<1x256xf32>
    %c0_55 = arith.constant 0 : index
    %c161 = arith.constant 161 : index
    %215 = vector.load %arg5[%c0_55, %c161] : memref<1x512xf32, #tpu.memory_space<vmem>>, vector<1x256xf32>
    %c39 = arith.constant 39 : index
    %216 = memref.load %arg1[%c39] : memref<49xf32, #tpu.memory_space<smem>>
    %217 = vector.broadcast %216 : f32 to vector<1x256xf32>
    %218 = arith.mulf %215, %217 : vector<1x256xf32>
    %219 = arith.addf %214, %218 : vector<1x256xf32>
    %c0_56 = arith.constant 0 : index
    %c177 = arith.constant 177 : index
    %220 = vector.load %arg5[%c0_56, %c177] : memref<1x512xf32, #tpu.memory_space<vmem>>, vector<1x256xf32>
    %c46 = arith.constant 46 : index
    %221 = memref.load %arg1[%c46] : memref<49xf32, #tpu.memory_space<smem>>
    %222 = vector.broadcast %221 : f32 to vector<1x256xf32>
    %223 = arith.mulf %220, %222 : vector<1x256xf32>
    %224 = arith.addf %219, %223 : vector<1x256xf32>
    %c-1_i32 = arith.constant -1 : i32
    %225 = vector.broadcast %c-1_i32 : i32 to vector<1x256xi32>
    %226 = arith.cmpi sge, %21, %225 : vector<1x256xi32>
    %c15_i32 = arith.constant 15 : i32
    %227 = vector.broadcast %c15_i32 : i32 to vector<1x256xi32>
    %228 = arith.cmpi slt, %21, %227 : vector<1x256xi32>
    %229 = arith.andi %226, %228 : vector<1x256xi1>
    %cst_57 = arith.constant 0.000000e+00 : f32
    %230 = vector.broadcast %cst_57 : f32 to vector<1x256xf32>
    %231 = arith.select %229, %224, %230 : vector<1x256xi1>, vector<1x256xf32>
    %232 = arith.addf %190, %231 : vector<1x256xf32>
    %c0_58 = arith.constant 0 : index
    %c82 = arith.constant 82 : index
    %233 = vector.load %arg5[%c0_58, %c82] : memref<1x512xf32, #tpu.memory_space<vmem>>, vector<1x256xf32>
    %c5 = arith.constant 5 : index
    %234 = memref.load %arg1[%c5] : memref<49xf32, #tpu.memory_space<smem>>
    %235 = vector.broadcast %234 : f32 to vector<1x256xf32>
    %236 = arith.mulf %233, %235 : vector<1x256xf32>
    %c0_59 = arith.constant 0 : index
    %c98 = arith.constant 98 : index
    %237 = vector.load %arg5[%c0_59, %c98] : memref<1x512xf32, #tpu.memory_space<vmem>>, vector<1x256xf32>
    %c12 = arith.constant 12 : index
    %238 = memref.load %arg1[%c12] : memref<49xf32, #tpu.memory_space<smem>>
    %239 = vector.broadcast %238 : f32 to vector<1x256xf32>
    %240 = arith.mulf %237, %239 : vector<1x256xf32>
    %241 = arith.addf %236, %240 : vector<1x256xf32>
    %c0_60 = arith.constant 0 : index
    %c114 = arith.constant 114 : index
    %242 = vector.load %arg5[%c0_60, %c114] : memref<1x512xf32, #tpu.memory_space<vmem>>, vector<1x256xf32>
    %c19 = arith.constant 19 : index
    %243 = memref.load %arg1[%c19] : memref<49xf32, #tpu.memory_space<smem>>
    %244 = vector.broadcast %243 : f32 to vector<1x256xf32>
    %245 = arith.mulf %242, %244 : vector<1x256xf32>
    %246 = arith.addf %241, %245 : vector<1x256xf32>
    %c0_61 = arith.constant 0 : index
    %c130 = arith.constant 130 : index
    %247 = vector.load %arg5[%c0_61, %c130] : memref<1x512xf32, #tpu.memory_space<vmem>>, vector<1x256xf32>
    %c26 = arith.constant 26 : index
    %248 = memref.load %arg1[%c26] : memref<49xf32, #tpu.memory_space<smem>>
    %249 = vector.broadcast %248 : f32 to vector<1x256xf32>
    %250 = arith.mulf %247, %249 : vector<1x256xf32>
    %251 = arith.addf %246, %250 : vector<1x256xf32>
    %c0_62 = arith.constant 0 : index
    %c146 = arith.constant 146 : index
    %252 = vector.load %arg5[%c0_62, %c146] : memref<1x512xf32, #tpu.memory_space<vmem>>, vector<1x256xf32>
    %c33 = arith.constant 33 : index
    %253 = memref.load %arg1[%c33] : memref<49xf32, #tpu.memory_space<smem>>
    %254 = vector.broadcast %253 : f32 to vector<1x256xf32>
    %255 = arith.mulf %252, %254 : vector<1x256xf32>
    %256 = arith.addf %251, %255 : vector<1x256xf32>
    %c0_63 = arith.constant 0 : index
    %c162 = arith.constant 162 : index
    %257 = vector.load %arg5[%c0_63, %c162] : memref<1x512xf32, #tpu.memory_space<vmem>>, vector<1x256xf32>
    %c40 = arith.constant 40 : index
    %258 = memref.load %arg1[%c40] : memref<49xf32, #tpu.memory_space<smem>>
    %259 = vector.broadcast %258 : f32 to vector<1x256xf32>
    %260 = arith.mulf %257, %259 : vector<1x256xf32>
    %261 = arith.addf %256, %260 : vector<1x256xf32>
    %c0_64 = arith.constant 0 : index
    %c178 = arith.constant 178 : index
    %262 = vector.load %arg5[%c0_64, %c178] : memref<1x512xf32, #tpu.memory_space<vmem>>, vector<1x256xf32>
    %c47 = arith.constant 47 : index
    %263 = memref.load %arg1[%c47] : memref<49xf32, #tpu.memory_space<smem>>
    %264 = vector.broadcast %263 : f32 to vector<1x256xf32>
    %265 = arith.mulf %262, %264 : vector<1x256xf32>
    %266 = arith.addf %261, %265 : vector<1x256xf32>
    %c-2_i32 = arith.constant -2 : i32
    %267 = vector.broadcast %c-2_i32 : i32 to vector<1x256xi32>
    %268 = arith.cmpi sge, %21, %267 : vector<1x256xi32>
    %c14_i32 = arith.constant 14 : i32
    %269 = vector.broadcast %c14_i32 : i32 to vector<1x256xi32>
    %270 = arith.cmpi slt, %21, %269 : vector<1x256xi32>
    %271 = arith.andi %268, %270 : vector<1x256xi1>
    %cst_65 = arith.constant 0.000000e+00 : f32
    %272 = vector.broadcast %cst_65 : f32 to vector<1x256xf32>
    %273 = arith.select %271, %266, %272 : vector<1x256xi1>, vector<1x256xf32>
    %274 = arith.addf %232, %273 : vector<1x256xf32>
    %c0_66 = arith.constant 0 : index
    %c83 = arith.constant 83 : index
    %275 = vector.load %arg5[%c0_66, %c83] : memref<1x512xf32, #tpu.memory_space<vmem>>, vector<1x256xf32>
    %c6 = arith.constant 6 : index
    %276 = memref.load %arg1[%c6] : memref<49xf32, #tpu.memory_space<smem>>
    %277 = vector.broadcast %276 : f32 to vector<1x256xf32>
    %278 = arith.mulf %275, %277 : vector<1x256xf32>
    %c0_67 = arith.constant 0 : index
    %c99 = arith.constant 99 : index
    %279 = vector.load %arg5[%c0_67, %c99] : memref<1x512xf32, #tpu.memory_space<vmem>>, vector<1x256xf32>
    %c13 = arith.constant 13 : index
    %280 = memref.load %arg1[%c13] : memref<49xf32, #tpu.memory_space<smem>>
    %281 = vector.broadcast %280 : f32 to vector<1x256xf32>
    %282 = arith.mulf %279, %281 : vector<1x256xf32>
    %283 = arith.addf %278, %282 : vector<1x256xf32>
    %c0_68 = arith.constant 0 : index
    %c115 = arith.constant 115 : index
    %284 = vector.load %arg5[%c0_68, %c115] : memref<1x512xf32, #tpu.memory_space<vmem>>, vector<1x256xf32>
    %c20 = arith.constant 20 : index
    %285 = memref.load %arg1[%c20] : memref<49xf32, #tpu.memory_space<smem>>
    %286 = vector.broadcast %285 : f32 to vector<1x256xf32>
    %287 = arith.mulf %284, %286 : vector<1x256xf32>
    %288 = arith.addf %283, %287 : vector<1x256xf32>
    %c0_69 = arith.constant 0 : index
    %c131 = arith.constant 131 : index
    %289 = vector.load %arg5[%c0_69, %c131] : memref<1x512xf32, #tpu.memory_space<vmem>>, vector<1x256xf32>
    %c27 = arith.constant 27 : index
    %290 = memref.load %arg1[%c27] : memref<49xf32, #tpu.memory_space<smem>>
    %291 = vector.broadcast %290 : f32 to vector<1x256xf32>
    %292 = arith.mulf %289, %291 : vector<1x256xf32>
    %293 = arith.addf %288, %292 : vector<1x256xf32>
    %c0_70 = arith.constant 0 : index
    %c147 = arith.constant 147 : index
    %294 = vector.load %arg5[%c0_70, %c147] : memref<1x512xf32, #tpu.memory_space<vmem>>, vector<1x256xf32>
    %c34 = arith.constant 34 : index
    %295 = memref.load %arg1[%c34] : memref<49xf32, #tpu.memory_space<smem>>
    %296 = vector.broadcast %295 : f32 to vector<1x256xf32>
    %297 = arith.mulf %294, %296 : vector<1x256xf32>
    %298 = arith.addf %293, %297 : vector<1x256xf32>
    %c0_71 = arith.constant 0 : index
    %c163 = arith.constant 163 : index
    %299 = vector.load %arg5[%c0_71, %c163] : memref<1x512xf32, #tpu.memory_space<vmem>>, vector<1x256xf32>
    %c41 = arith.constant 41 : index
    %300 = memref.load %arg1[%c41] : memref<49xf32, #tpu.memory_space<smem>>
    %301 = vector.broadcast %300 : f32 to vector<1x256xf32>
    %302 = arith.mulf %299, %301 : vector<1x256xf32>
    %303 = arith.addf %298, %302 : vector<1x256xf32>
    %c0_72 = arith.constant 0 : index
    %c179 = arith.constant 179 : index
    %304 = vector.load %arg5[%c0_72, %c179] : memref<1x512xf32, #tpu.memory_space<vmem>>, vector<1x256xf32>
    %c48 = arith.constant 48 : index
    %305 = memref.load %arg1[%c48] : memref<49xf32, #tpu.memory_space<smem>>
    %306 = vector.broadcast %305 : f32 to vector<1x256xf32>
    %307 = arith.mulf %304, %306 : vector<1x256xf32>
    %308 = arith.addf %303, %307 : vector<1x256xf32>
    %c-3_i32 = arith.constant -3 : i32
    %309 = vector.broadcast %c-3_i32 : i32 to vector<1x256xi32>
    %310 = arith.cmpi sge, %21, %309 : vector<1x256xi32>
    %c13_i32 = arith.constant 13 : i32
    %311 = vector.broadcast %c13_i32 : i32 to vector<1x256xi32>
    %312 = arith.cmpi slt, %21, %311 : vector<1x256xi32>
    %313 = arith.andi %310, %312 : vector<1x256xi1>
    %cst_73 = arith.constant 0.000000e+00 : f32
    %314 = vector.broadcast %cst_73 : f32 to vector<1x256xf32>
    %315 = arith.select %313, %308, %314 : vector<1x256xi1>, vector<1x256xf32>
    %316 = arith.addf %274, %315 : vector<1x256xf32>
    %317 = arith.negf %316 : vector<1x256xf32>
    %318 = math.exp %317 : vector<1x256xf32>
    %cst_74 = arith.constant 1.000000e+00 : f32
    %319 = vector.broadcast %cst_74 : f32 to vector<1x256xf32>
    %320 = arith.addf %319, %318 : vector<1x256xf32>
    %321 = arith.divf %319, %320 : vector<1x256xf32>
    %322 = vector.shape_cast %321 : vector<1x256xf32> to vector<1x256xf32>
    %323 = vector.broadcast %322 : vector<1x256xf32> to vector<4x256xf32>
    %c0_i32_75 = arith.constant 0 : i32
    %c4_i32_76 = arith.constant 4 : i32
    %324 = arith.muli %c0_i32_75, %c4_i32_76 : i32
    %325 = tpu.assume_multiple %324, 4 : i32
    %c0_77 = arith.constant 0 : index
    %326 = arith.index_cast %325 : i32 to index
    %c0_78 = arith.constant 0 : index
    %327 = vector.load %arg3[%c0_77, %326, %c0_78] : memref<1x4x256xf32, #tpu.memory_space<vmem>>, vector<1x4x256xf32>
    %328 = vector.shape_cast %327 : vector<1x4x256xf32> to vector<4x256xf32>
    %329 = arith.mulf %323, %328 : vector<4x256xf32>
    %c0_79 = arith.constant 0 : index
    %330 = arith.index_cast %325 : i32 to index
    %c0_80 = arith.constant 0 : index
    %331 = vector.load %arg4[%c0_79, %330, %c0_80] : memref<1x4x256xf32, #tpu.memory_space<vmem>>, vector<1x4x256xf32>
    %332 = vector.shape_cast %331 : vector<1x4x256xf32> to vector<4x256xf32>
    %333 = vector.shape_cast %329 : vector<4x256xf32> to vector<1x4x256xf32>
    tpu.vector_store %arg4[%c0_79, %330, %c0_80], %333 {strides = array<i32>} : memref<1x4x256xf32, #tpu.memory_space<vmem>>, vector<1x4x256xf32>,
    %c1_i32_81 = arith.constant 1 : i32
    return
  }
  func.func @transform_0(%arg0: i32) -> i32 {
    %c0_i32 = arith.constant 0 : i32
    %c0_i32_0 = arith.constant 0 : i32
    return %c0_i32 : i32
  }
  func.func @transform_1(%arg0: i32) -> (i32, i32) {
    %c0_i32 = arith.constant 0 : i32
    %c0_i32_0 = arith.constant 0 : i32
    %c0_i32_1 = arith.constant 0 : i32
    return %c0_i32, %c0_i32_0 : i32, i32
  }
  func.func @transform_2(%arg0: i32) -> (i32, i32, i32) {
    %c0_i32 = arith.constant 0 : i32
    %c0_i32_0 = arith.constant 0 : i32
    %c0_i32_1 = arith.constant 0 : i32
    return %arg0, %c0_i32, %c0_i32_0 : i32, i32, i32
  }
  func.func @transform_3(%arg0: i32) -> (i32, i32, i32) {
    %c0_i32 = arith.constant 0 : i32
    %c0_i32_0 = arith.constant 0 : i32
    %c0_i32_1 = arith.constant 0 : i32
    return %arg0, %c0_i32, %c0_i32_0 : i32, i32, i32
  }
}

</mosaic_0001>

<llo_original>
// kernel: tpu_custom_call.1
$region0: #{tpu_custom_call.1}
  #allocation0 [shape = 'u32[]', space=smem, size = 0x4, offset = 0x4, fixed_abs, tag = 'smem constant byte address 0x4 - core index']
  #allocation1 [shape = 'u32[144,128]{1,0:T(1,128)}', space=vmem, size = 0x12000, scoped, tag = 'internal scratch']
  #allocation2 [shape = 'f32[1,512]{1,0:T(1,128)}', space=vmem, size = 0x800, scoped, tag = 'scratch operand']
  %s0 = inlined_call_operand.hbm [shape: f32[49], index: 0, kind: input, shape index: {}]
  %s1 = inlined_call_operand.vmem [shape: s32[1,256], index: 1, kind: input, shape index: {}]
  %s2 = inlined_call_operand.hbm [shape: f32[2,4,256], index: 2, kind: input, shape index: {}]
  %s3 = inlined_call_operand.hbm [shape: f32[2,4,256], index: 3, kind: output, shape index: {}]
  %s4 = sld [smem:[#allocation0]]
  $region53: #{tpu_custom_call.1} parent=0
    _
  %s6 = ssub.s32 1, %s4
  %s7 = scalar_select 0, %s6, %s4
  $region1: #{tpu_custom_call.1} parent=0
    #allocation3 [shape = 'u8[512]{0}', space=smem, size = 0x200, scoped, tag = 'input window, operand 0, single buffered']
    #allocation4 [shape = 's32[2]{0}', space=sflag, size = 0x8, scoped, tag = 'scoped memory for tpu_custom_call.1']
    #allocation5 [shape = 's32[2]{0}', space=sflag, size = 0x8, scoped, tag = 'scoped memory for tpu_custom_call.1']
    #allocation6 [shape = 's32[2]{0}', space=sflag, size = 0x8, scoped, tag = 'scoped memory for tpu_custom_call.1']
    #allocation7 [shape = 'u8[8192]{0}', space=vmem, size = 0x2000, scoped, tag = 'input window, operand 2']
    #allocation8 [shape = 'u8[8192]{0}', space=vmem, size = 0x2000, scoped, tag = 'output window, operand 0']
    %8 = vsyncpa [#allocation6], 0
    %9 = vsyncpa [#allocation4], 0
    %s10 = scalar_lea.sflag [#allocation4], 1
    %11 = vsyncpa %s10, 0
    %12 = vsyncpa [#allocation5], 0
    %s13 = scalar_lea.sflag [#allocation5], 1
    %14 = vsyncpa %s13, 0
    loop: start=0, step=1, limit=4
    $region2: #{tpu_custom_call.1} parent=1 // loop_pre_header
      _
    $region3: #{tpu_custom_call.1} parent=1 // loop_header
      %s16 = sphi 0, %s20
      %p17 = scmp.ge.s32.totalorder %s16, 4
      %s24 = sphi 0, %s24
      %s26 = sphi 0, %s24
      %s27 = sphi 0, %s26
      %s41 = sphi 0, %s27
      %s45 = sphi 0, %s45
      %s47 = sphi 0, %s45
      %s48 = sphi 0, %s47
      %s62 = sphi 0, %s48
      %s68 = sphi 0, %s70
      %s71 = sphi 0, %s68
      %s72 = sphi 0, %s71
      %s88 = sphi 0, %s72
      %s94 = sphi 0, %s96
      %s97 = sphi 0, %s94
      %s98 = sphi 0, %s97
      %s114 = sphi 0, %s98
    $region4: #{tpu_custom_call.1} parent=1 // loop_header_branch
      %19 = sbr.rel (%p17) target = $region8
    $region5: #{tpu_custom_call.1} parent=1 // loop_body
      %s21 = ssub.s32 %s16, 1
      %s22 = ssub.s32 %s16, 2
      %s23 = sadd.s32 %s16, 1
      %s25 = sadd.s32 %s24, 1
      %p28 = scmp.eq.s32.totalorder %s16, 1
      %p29 = scmp.ne.s32.totalorder %s24, %s26
      %p30 = scmp.eq.s32.totalorder %s16, 0
      %p31 = por %p29, %p30
      %p32 = scmp.ne.s32.totalorder %s24, %s26
      %p33 = scmp.eq.s32.totalorder %s21, 1
      %p34 = por %p32, %p33
      %p35 = scmp.ne.s32.totalorder %s26, %s27
      %p36 = scmp.eq.s32.totalorder %s21, 0
      %p37 = por %p35, %p36
      %p38 = scmp.ne.s32.totalorder %s26, %s27
      %p39 = scmp.eq.s32.totalorder %s22, 1
      %p40 = por %p38, %p39
      %p42 = scmp.ne.s32.totalorder %s27, %s41
      %p43 = scmp.eq.s32.totalorder %s22, 0
      %p44 = por %p42, %p43
      %s46 = sadd.s32 %s45, 1
      %p49 = scmp.eq.s32.totalorder %s16, 1
      %p50 = scmp.ne.s32.totalorder %s45, %s47
      %p51 = scmp.eq.s32.totalorder %s16, 0
      %p52 = por %p50, %p51
      %p53 = scmp.ne.s32.totalorder %s45, %s47
      %p54 = scmp.eq.s32.totalorder %s21, 1
      %p55 = por %p53, %p54
      %p56 = scmp.ne.s32.totalorder %s47, %s48
      %p57 = scmp.eq.s32.totalorder %s21, 0
      %p58 = por %p56, %p57
      %p59 = scmp.ne.s32.totalorder %s47, %s48
      %p60 = scmp.eq.s32.totalorder %s22, 1
      %p61 = por %p59, %p60
      %p63 = scmp.ne.s32.totalorder %s48, %s62
      %p64 = scmp.eq.s32.totalorder %s22, 0
      %p65 = por %p63, %p64
      %s66 = ssub.s32 %s16, %s23
      %p67 = scmp.eq.s32.totalorder %s66, 0
      %s69 = sadd.s32 %s68, 1
      %s70 = scalar_select %p67, %s68, %s69
      %p73 = pneg %p67
      %p74 = scmp.eq.s32.totalorder %s16, 1
      %p75 = por %p73, %p74
      %p76 = scmp.ne.s32.totalorder %s68, %s71
      %p77 = scmp.eq.s32.totalorder %s16, 0
      %p78 = por %p76, %p77
      %p79 = scmp.ne.s32.totalorder %s68, %s71
      %p80 = scmp.eq.s32.totalorder %s21, 1
      %p81 = por %p79, %p80
      %p82 = scmp.ne.s32.totalorder %s71, %s72
      %p83 = scmp.eq.s32.totalorder %s21, 0
      %p84 = por %p82, %p83
      %p85 = scmp.ne.s32.totalorder %s71, %s72
      %p86 = scmp.eq.s32.totalorder %s22, 1
      %p87 = por %p85, %p86
      %p89 = scmp.ne.s32.totalorder %s72, %s88
      %p90 = scmp.eq.s32.totalorder %s22, 0
      %p91 = por %p89, %p90
      %s92 = ssub.s32 %s16, %s23
      %p93 = scmp.eq.s32.totalorder %s92, 0
      %s95 = sadd.s32 %s94, 1
      %s96 = scalar_select %p93, %s94, %s95
      %p99 = pneg %p93
      %p100 = scmp.eq.s32.totalorder %s16, 1
      %p101 = por %p99, %p100
      %p102 = scmp.ne.s32.totalorder %s94, %s97
      %p103 = scmp.eq.s32.totalorder %s16, 0
      %p104 = por %p102, %p103
      %p105 = scmp.ne.s32.totalorder %s94, %s97
      %p106 = scmp.eq.s32.totalorder %s21, 1
      %p107 = por %p105, %p106
      %p108 = scmp.ne.s32.totalorder %s97, %s98
      %p109 = scmp.eq.s32.totalorder %s21, 0
      %p110 = por %p108, %p109
      %p111 = scmp.ne.s32.totalorder %s97, %s98
      %p112 = scmp.eq.s32.totalorder %s22, 1
      %p113 = por %p111, %p112
      %p115 = scmp.ne.s32.totalorder %s98, %s114
      %p116 = scmp.eq.s32.totalorder %s22, 0
      %p117 = por %p115, %p116
      %p118 = scmp.le.s32.totalorder 1, %s16
      %p119 = scmp.lt.s32.totalorder %s16, 3
      %p120 = pnand %p118, %p119
      %p121 = pneg %p120
      // Predicated region
      $region9: #{tpu_custom_call.1} parent=5 // pred_check
        _
      $region10: #{tpu_custom_call.1} parent=5 // pred_check_branch
        %123 = sbr.rel (%p120) target = $region12
      $region11: #{tpu_custom_call.1} parent=5 // pred_region
        %s124 = ssub.s32 %s16, 1
        // Predicated region
        $region13: #{tpu_custom_call.1} parent=11 // pred_check
          %p125 = pneg %p37
        $region14: #{tpu_custom_call.1} parent=11 // pred_check_branch
          %127 = sbr.rel (%p125) target = $region16
        $region15: #{tpu_custom_call.1} parent=11 // pred_region
          %s129 = ssub.s32 16, 16
          %130 = vsyncadd [#allocation6], %s129
          %133 = dma.hbm_to_smem %s0, 16, [#allocation3], [#allocation6]
        $region16: #{tpu_custom_call.1} parent=11 // pred_fallthru
          _
        // Predicated region
        $region17: #{tpu_custom_call.1} parent=11 // pred_check
          %p134 = pneg %p58
        $region18: #{tpu_custom_call.1} parent=11 // pred_check_branch
          %136 = sbr.rel (%p134) target = $region20
        $region19: #{tpu_custom_call.1} parent=11 // pred_region
          _
        $region20: #{tpu_custom_call.1} parent=11 // pred_fallthru
          _
      $region12: #{tpu_custom_call.1} parent=5 // pred_fallthru
        _
      %p137 = scmp.lt.s32.totalorder %s16, 2
      // Predicated region
      $region21: #{tpu_custom_call.1} parent=5 // pred_check
        %p138 = pneg %p137
      $region22: #{tpu_custom_call.1} parent=5 // pred_check_branch
        %140 = sbr.rel (%p138) target = $region24
      $region23: #{tpu_custom_call.1} parent=5 // pred_region
        // Predicated region
        $region25: #{tpu_custom_call.1} parent=23 // pred_check
          %p141 = pneg %p78
        $region26: #{tpu_custom_call.1} parent=23 // pred_check_branch
          %143 = sbr.rel (%p141) target = $region28
        $region27: #{tpu_custom_call.1} parent=23 // pred_region
          %s144 = sand.u32 %s68, 1
          %s145 = scalar_lea.sflag [#allocation4], %s144
          %s146 = sand.u32 %s68, 1
          %s147 = smul.addr %s146, 8
          %s148 = scalar_lea.vmem [#allocation7], %s147
          %s150 = ssub.s32 128, 128
          %151 = vsyncadd %s145, %s150
          %s152 = smul.addr %s16, 2
          %s153 = smul.addr %s152, 64
          %s154 = scalar_lea.hbm %s2, %s153
          %s156 = sshll.u32 %s148, 4
          %s157 = int_to_ptr.vmem [resolvable:$true] %s156
          %159 = dma.hbm_to_vmem [thread:$0]  %s154, 128, %s157, %s145
        $region28: #{tpu_custom_call.1} parent=23 // pred_fallthru
          _
      $region24: #{tpu_custom_call.1} parent=5 // pred_fallthru
        _
      %p160 = scmp.le.s32.totalorder 1, %s16
      %p161 = scmp.lt.s32.totalorder %s16, 3
      %p162 = pnand %p160, %p161
      %p163 = pneg %p162
      // Predicated region
      $region29: #{tpu_custom_call.1} parent=5 // pred_check
        _
      $region30: #{tpu_custom_call.1} parent=5 // pred_check_branch
        %165 = sbr.rel (%p162) target = $region32
      $region31: #{tpu_custom_call.1} parent=5 // pred_region
        %s166 = ssub.s32 %s16, 1
        // Predicated region
        $region33: #{tpu_custom_call.1} parent=31 // pred_check
          %p167 = pneg %p37
        $region34: #{tpu_custom_call.1} parent=31 // pred_check_branch
          %169 = sbr.rel (%p167) target = $region36
        $region35: #{tpu_custom_call.1} parent=31 // pred_region
          %170 = dma.done [#allocation6], 16
        $region36: #{tpu_custom_call.1} parent=31 // pred_fallthru
          _
        %s171 = sand.u32 %s71, 1
        %s172 = scalar_lea.sflag [#allocation4], %s171
        %s173 = sand.u32 %s71, 1
        %s174 = smul.addr %s173, 8
        %s175 = scalar_lea.vmem [#allocation7], %s174
        // Predicated region
        $region37: #{tpu_custom_call.1} parent=31 // pred_check
          %p176 = pneg %p84
        $region38: #{tpu_custom_call.1} parent=31 // pred_check_branch
          %178 = sbr.rel (%p176) target = $region40
        $region39: #{tpu_custom_call.1} parent=31 // pred_region
          %179 = dma.done %s172, 128
        $region40: #{tpu_custom_call.1} parent=31 // pred_fallthru
          _
        %180 = sfence
        %p181 = pneg %p37
        %p182 = pneg %p34
        %p183 = pneg %p58
        %p184 = pneg %p55
        %s185 = sand.u32 %s71, 1
        %s186 = scalar_lea.sflag [#allocation4], %s185
        %s187 = sand.u32 %s71, 1
        %s188 = smul.addr %s187, 8
        %s189 = scalar_lea.vmem [#allocation7], %s188
        %p190 = pneg %p84
        %p191 = pneg %p81
        %p192 = pneg %p110
        %p193 = pneg %p107
        %s194 = sand.u32 %s97, 1
        %s195 = scalar_lea.sflag [#allocation5], %s194
        %s196 = sand.u32 %s97, 1
        %s197 = smul.addr %s196, 8
        %s198 = scalar_lea.vmem [#allocation8], %s197
        %s199 = smul.u32 0, 2
        %s200 = smul.addr %s199, 4
        %s201 = scalar_lea.vmem %s175, %s200 [#allocation7]
        %v202 = vld [vmem:[%s201] sm:$0xff]
        %v203 = vadd.f32 %v202, 0.0
        %v205 = vcombine.high %v202, %v202
        %vm207 = vcmask 1043456
        %v208 = vsel %vm207, %v202, -inf
        %v209 = vrot.slane %v208, 4
        %v210 = vmax.f32 %v208, %v209
        %v211 = vrot.slane %v210, 2
        %v212 = vmax.f32 %v210, %v211
        %v213 = vrot.slane %v212, 1
        %v214 = vmax.f32 %v212, %v213
        %v215 = vsel %vm207, %v205, -inf
        %v216 = vrot.slane %v215, 4
        %v217 = vmax.f32 %v215, %v216
        %v218 = vrot.slane %v217, 2
        %v219 = vmax.f32 %v217, %v218
        %v220 = vrot.slane %v219, 1
        %v221 = vmax.f32 %v219, %v220
        %v223 = vcombine.high %v203, %v203
        %v225 = vsel %vm207, %v203, 0.0
        %v226 = vrot.slane %v225, 4
        %v227 = vadd.f32 %v225, %v226
        %v228 = vrot.slane %v227, 2
        %v229 = vadd.f32 %v227, %v228
        %v230 = vrot.slane %v229, 1
        %v231 = vadd.f32 %v229, %v230
        %v232 = vsel %vm207, %v223, 0.0
        %v233 = vrot.slane %v232, 4
        %v234 = vadd.f32 %v232, %v233
        %v235 = vrot.slane %v234, 2
        %v236 = vadd.f32 %v234, %v235
        %v237 = vrot.slane %v236, 1
        %v238 = vadd.f32 %v236, %v237
        %v239 = vmul.f32 %v231, 0.25
        %v240 = vmul.f32 %v238, 0.25
        %v241 = vadd.f32 %v214, %v239
        %v242 = vadd.f32 %v221, %v240
        %v243 = vlaneseq
        %vm244 = vcmp.ge.s32.totalorder %v243, 0
        %vm245 = vcmp.lt.s32.totalorder %v243, 128
        %vm246 = vmand %vm244, %vm245
        %247 = vst.msk [vmem:[#allocation2] sm:$0x1] %vm246, 0.0
        %248 = vst.msk [vmem:[#allocation2 + $0x3] sm:$0x1] %vm246, 0.0
        %v251 = vcombine.low %v241, %v242
        %v253 = vunpack.c.l.s4 1966171168
        %v254 = vunpack.c.0.s8 %v253
        %v255 = vlaneseq
        %v256 = vshrl.u32 %v255, 7
        %v257 = vsub.s32 %v254, %v256
        %v258 = vrot.slane %v251, %v257
        %v260 = vunpack.c.l.s4 1966171168
        %v261 = vunpack.c.0.s8 %v260
        %v262 = vlaneseq
        %v263 = vshrl.u32 %v262, 7
        %v264 = vsub.s32 %v261, %v263
        %v265 = vrot.slane %v258, %v264
        %vm267 = vcmp.lt.s32.totalorder %v243, 256
        %vm268 = vmand %vm244, %vm267
        %269 = vst.msk [vmem:[#allocation2 + $0x1] sm:$0x3] %vm268, %v265
        %v270 = vld [vmem:[%s1] sm:$0x3]
        %v271 = vld [vmem:[#allocation2] sm:$0x7]
        %s272 = sld [smem:[#allocation3]]
        %v273 = vstv %s272
        %v274 = vmul.f32 %v271, %v273
        %s275 = sld [smem:[#allocation3 + $0x7]]
        %v276 = vstv %s275
        %v277 = vmul.f32 %v271, %v276
        %279 = vrot.lane.b32.xlu0 %v277, 112
        %v280 = vpop.permute.xlu0 %279
        %v281 = vrot.slane %v280, 1
        %vm282 = vcmask 916480
        %v283 = vsel %vm282, %v280, %v281
        %v285 = vadd.f32 %v274, %v283
        %s286 = sld [smem:[#allocation3 + $0xe]]
        %v287 = vstv %s286
        %v288 = vmul.f32 %v271, %v287
        %290 = vrot.lane.b32.xlu0 %v288, 96
        %v291 = vpop.permute.xlu0 %290
        %v292 = vrot.slane %v291, 1
        %vm293 = vcmask 785408
        %v294 = vsel %vm293, %v291, %v292
        %v296 = vadd.f32 %v285, %v294
        %s297 = sld [smem:[#allocation3 + $0x15]]
        %v298 = vstv %s297
        %v299 = vmul.f32 %v271, %v298
        %301 = vrot.lane.b32.xlu0 %v299, 80
        %v302 = vpop.permute.xlu0 %301
        %v303 = vrot.slane %v302, 1
        %vm304 = vcmask 654336
        %v305 = vsel %vm304, %v302, %v303
        %v307 = vadd.f32 %v296, %v305
        %v308 = vld [vmem:[#allocation2 + $0x1] sm:$0x7]
        %s309 = sld [smem:[#allocation3 + $0x1c]]
        %v310 = vstv %s309
        %v311 = vmul.f32 %v308, %v310
        %313 = vrot.lane.b32.xlu0 %v311, 64
        %v314 = vpop.permute.xlu0 %313
        %v315 = vrot.slane %v314, 7
        %vm316 = vcmask 523264
        %v317 = vsel %vm316, %v315, %v314
        %v319 = vadd.f32 %v307, %v317
        %s320 = sld [smem:[#allocation3 + $0x23]]
        %v321 = vstv %s320
        %v322 = vmul.f32 %v308, %v321
        %324 = vrot.lane.b32.xlu0 %v322, 48
        %v325 = vpop.permute.xlu0 %324
        %v326 = vrot.slane %v325, 7
        %vm327 = vcmask 392192
        %v328 = vsel %vm327, %v326, %v325
        %v330 = vadd.f32 %v319, %v328
        %s331 = sld [smem:[#allocation3 + $0x2a]]
        %v332 = vstv %s331
        %v333 = vmul.f32 %v308, %v332
        %335 = vrot.lane.b32.xlu0 %v333, 32
        %v336 = vpop.permute.xlu0 %335
        %v337 = vrot.slane %v336, 7
        %vm338 = vcmask 261120
        %v339 = vsel %vm338, %v337, %v336
        %v341 = vadd.f32 %v330, %v339
        %vm342 = vcmp.ge.s32.totalorder %v270, 3
        %vm343 = vcmp.lt.s32.totalorder %v270, 19
        %vm344 = vmand %vm342, %vm343
        %346 = vrot.lane.b32.xlu0 %v341, 51
        %v347 = vpop.permute.xlu0 %346
        %v348 = vrot.slane %v347, 1
        %vm349 = vcmask 416768
        %v350 = vsel %vm349, %v347, %v348
        %v352 = vsel %vm344, %v350, 0.0
        %v353 = vadd.f32 %v352, 0.0
        %s354 = sld [smem:[#allocation3 + $0x1]]
        %v355 = vstv %s354
        %v356 = vmul.f32 %v271, %v355
        %s357 = sld [smem:[#allocation3 + $0x8]]
        %v358 = vstv %s357
        %v359 = vmul.f32 %v271, %v358
        %361 = vrot.lane.b32.xlu0 %v359, 112
        %v362 = vpop.permute.xlu0 %361
        %v363 = vrot.slane %v362, 1
        %v364 = vsel %vm282, %v362, %v363
        %v366 = vadd.f32 %v356, %v364
        %s367 = sld [smem:[#allocation3 + $0xf]]
        %v368 = vstv %s367
        %v369 = vmul.f32 %v271, %v368
        %371 = vrot.lane.b32.xlu0 %v369, 96
        %v372 = vpop.permute.xlu0 %371
        %v373 = vrot.slane %v372, 1
        %v374 = vsel %vm293, %v372, %v373
        %v376 = vadd.f32 %v366, %v374
        %s377 = sld [smem:[#allocation3 + $0x16]]
        %v378 = vstv %s377
        %v379 = vmul.f32 %v271, %v378
        %381 = vrot.lane.b32.xlu0 %v379, 80
        %v382 = vpop.permute.xlu0 %381
        %v383 = vrot.slane %v382, 1
        %v384 = vsel %vm304, %v382, %v383
        %v386 = vadd.f32 %v376, %v384
        %s387 = sld [smem:[#allocation3 + $0x1d]]
        %v388 = vstv %s387
        %v389 = vmul.f32 %v308, %v388
        %391 = vrot.lane.b32.xlu0 %v389, 64
        %v392 = vpop.permute.xlu0 %391
        %v393 = vrot.slane %v392, 7
        %v394 = vsel %vm316, %v393, %v392
        %v396 = vadd.f32 %v386, %v394
        %s397 = sld [smem:[#allocation3 + $0x24]]
        %v398 = vstv %s397
        %v399 = vmul.f32 %v308, %v398
        %401 = vrot.lane.b32.xlu0 %v399, 48
        %v402 = vpop.permute.xlu0 %401
        %v403 = vrot.slane %v402, 7
        %v404 = vsel %vm327, %v403, %v402
        %v406 = vadd.f32 %v396, %v404
        %s407 = sld [smem:[#allocation3 + $0x2b]]
        %v408 = vstv %s407
        %v409 = vmul.f32 %v308, %v408
        %411 = vrot.lane.b32.xlu0 %v409, 32
        %v412 = vpop.permute.xlu0 %411
        %v413 = vrot.slane %v412, 7
        %v414 = vsel %vm338, %v413, %v412
        %v416 = vadd.f32 %v406, %v414
        %vm417 = vcmp.ge.s32.totalorder %v270, 2
        %vm418 = vcmp.lt.s32.totalorder %v270, 18
        %vm419 = vmand %vm417, %vm418
        %421 = vrot.lane.b32.xlu0 %v416, 50
        %v422 = vpop.permute.xlu0 %421
        %v423 = vrot.slane %v422, 1
        %vm424 = vcmask 408576
        %v425 = vsel %vm424, %v422, %v423
        %v427 = vsel %vm419, %v425, 0.0
        %v428 = vadd.f32 %v353, %v427
        %s429 = sld [smem:[#allocation3 + $0x2]]
        %v430 = vstv %s429
        %v431 = vmul.f32 %v271, %v430
        %s432 = sld [smem:[#allocation3 + $0x9]]
        %v433 = vstv %s432
        %v434 = vmul.f32 %v271, %v433
        %436 = vrot.lane.b32.xlu0 %v434, 112
        %v437 = vpop.permute.xlu0 %436
        %v438 = vrot.slane %v437, 1
        %v439 = vsel %vm282, %v437, %v438
        %v441 = vadd.f32 %v431, %v439
        %s442 = sld [smem:[#allocation3 + $0x10]]
        %v443 = vstv %s442
        %v444 = vmul.f32 %v271, %v443
        %446 = vrot.lane.b32.xlu0 %v444, 96
        %v447 = vpop.permute.xlu0 %446
        %v448 = vrot.slane %v447, 1
        %v449 = vsel %vm293, %v447, %v448
        %v451 = vadd.f32 %v441, %v449
        %s452 = sld [smem:[#allocation3 + $0x17]]
        %v453 = vstv %s452
        %v454 = vmul.f32 %v271, %v453
        %456 = vrot.lane.b32.xlu0 %v454, 80
        %v457 = vpop.permute.xlu0 %456
        %v458 = vrot.slane %v457, 1
        %v459 = vsel %vm304, %v457, %v458
        %v461 = vadd.f32 %v451, %v459
        %s462 = sld [smem:[#allocation3 + $0x1e]]
        %v463 = vstv %s462
        %v464 = vmul.f32 %v308, %v463
        %466 = vrot.lane.b32.xlu0 %v464, 64
        %v467 = vpop.permute.xlu0 %466
        %v468 = vrot.slane %v467, 7
        %v469 = vsel %vm316, %v468, %v467
        %v471 = vadd.f32 %v461, %v469
        %s472 = sld [smem:[#allocation3 + $0x25]]
        %v473 = vstv %s472
        %v474 = vmul.f32 %v308, %v473
        %476 = vrot.lane.b32.xlu0 %v474, 48
        %v477 = vpop.permute.xlu0 %476
        %v478 = vrot.slane %v477, 7
        %v479 = vsel %vm327, %v478, %v477
        %v481 = vadd.f32 %v471, %v479
        %s482 = sld [smem:[#allocation3 + $0x2c]]
        %v483 = vstv %s482
        %v484 = vmul.f32 %v308, %v483
        %486 = vrot.lane.b32.xlu0 %v484, 32
        %v487 = vpop.permute.xlu0 %486
        %v488 = vrot.slane %v487, 7
        %v489 = vsel %vm338, %v488, %v487
        %v491 = vadd.f32 %v481, %v489
        %vm492 = vcmp.ge.s32.totalorder %v270, 1
        %vm493 = vcmp.lt.s32.totalorder %v270, 17
        %vm494 = vmand %vm492, %vm493
        %496 = vrot.lane.b32.xlu0 %v491, 49
        %v497 = vpop.permute.xlu0 %496
        %v498 = vrot.slane %v497, 1
        %vm499 = vcmask 400384
        %v500 = vsel %vm499, %v497, %v498
        %v502 = vsel %vm494, %v500, 0.0
        %v503 = vadd.f32 %v428, %v502
        %s504 = sld [smem:[#allocation3 + $0x3]]
        %v505 = vstv %s504
        %v506 = vmul.f32 %v271, %v505
        %s507 = sld [smem:[#allocation3 + $0xa]]
        %v508 = vstv %s507
        %v509 = vmul.f32 %v271, %v508
        %511 = vrot.lane.b32.xlu0 %v509, 112
        %v512 = vpop.permute.xlu0 %511
        %v513 = vrot.slane %v512, 1
        %v514 = vsel %vm282, %v512, %v513
        %v516 = vadd.f32 %v506, %v514
        %s517 = sld [smem:[#allocation3 + $0x11]]
        %v518 = vstv %s517
        %v519 = vmul.f32 %v271, %v518
        %521 = vrot.lane.b32.xlu0 %v519, 96
        %v522 = vpop.permute.xlu0 %521
        %v523 = vrot.slane %v522, 1
        %v524 = vsel %vm293, %v522, %v523
        %v526 = vadd.f32 %v516, %v524
        %v527 = vld [vmem:[#allocation2 + $0x1] sm:$0x3]
        %s528 = sld [smem:[#allocation3 + $0x18]]
        %v529 = vstv %s528
        %v530 = vmul.f32 %v527, %v529
        %532 = vrot.lane.b32.xlu0 %v530, 80
        %v533 = vpop.permute.xlu0 %532
        %v534 = vrot.slane %v533, 7
        %v535 = vsel %vm304, %v534, %v533
        %v537 = vadd.f32 %v526, %v535
        %s538 = sld [smem:[#allocation3 + $0x1f]]
        %v539 = vstv %s538
        %v540 = vmul.f32 %v308, %v539
        %542 = vrot.lane.b32.xlu0 %v540, 64
        %v543 = vpop.permute.xlu0 %542
        %v544 = vrot.slane %v543, 7
        %v545 = vsel %vm316, %v544, %v543
        %v547 = vadd.f32 %v537, %v545
        %s548 = sld [smem:[#allocation3 + $0x26]]
        %v549 = vstv %s548
        %v550 = vmul.f32 %v308, %v549
        %552 = vrot.lane.b32.xlu0 %v550, 48
        %v553 = vpop.permute.xlu0 %552
        %v554 = vrot.slane %v553, 7
        %v555 = vsel %vm327, %v554, %v553
        %v557 = vadd.f32 %v547, %v555
        %s558 = sld [smem:[#allocation3 + $0x2d]]
        %v559 = vstv %s558
        %v560 = vmul.f32 %v308, %v559
        %562 = vrot.lane.b32.xlu0 %v560, 32
        %v563 = vpop.permute.xlu0 %562
        %v564 = vrot.slane %v563, 7
        %v565 = vsel %vm338, %v564, %v563
        %v567 = vadd.f32 %v557, %v565
        %vm568 = vcmp.ge.s32.totalorder %v270, 0
        %vm569 = vcmp.lt.s32.totalorder %v270, 16
        %vm570 = vmand %vm568, %vm569
        %572 = vrot.lane.b32.xlu0 %v567, 48
        %v573 = vpop.permute.xlu0 %572
        %v574 = vrot.slane %v573, 1
        %v575 = vsel %vm327, %v573, %v574
        %v577 = vsel %vm570, %v575, 0.0
        %v578 = vadd.f32 %v503, %v577
        %s579 = sld [smem:[#allocation3 + $0x4]]
        %v580 = vstv %s579
        %v581 = vmul.f32 %v271, %v580
        %s582 = sld [smem:[#allocation3 + $0xb]]
        %v583 = vstv %s582
        %v584 = vmul.f32 %v271, %v583
        %586 = vrot.lane.b32.xlu0 %v584, 112
        %v587 = vpop.permute.xlu0 %586
        %v588 = vrot.slane %v587, 1
        %v589 = vsel %vm282, %v587, %v588
        %v591 = vadd.f32 %v581, %v589
        %s592 = sld [smem:[#allocation3 + $0x12]]
        %v593 = vstv %s592
        %v594 = vmul.f32 %v271, %v593
        %596 = vrot.lane.b32.xlu0 %v594, 96
        %v597 = vpop.permute.xlu0 %596
        %v598 = vrot.slane %v597, 1
        %v599 = vsel %vm293, %v597, %v598
        %v601 = vadd.f32 %v591, %v599
        %s602 = sld [smem:[#allocation3 + $0x19]]
        %v603 = vstv %s602
        %v604 = vmul.f32 %v308, %v603
        %606 = vrot.lane.b32.xlu0 %v604, 80
        %v607 = vpop.permute.xlu0 %606
        %v608 = vrot.slane %v607, 7
        %v609 = vsel %vm304, %v608, %v607
        %v611 = vadd.f32 %v601, %v609
        %s612 = sld [smem:[#allocation3 + $0x20]]
        %v613 = vstv %s612
        %v614 = vmul.f32 %v308, %v613
        %616 = vrot.lane.b32.xlu0 %v614, 64
        %v617 = vpop.permute.xlu0 %616
        %v618 = vrot.slane %v617, 7
        %v619 = vsel %vm316, %v618, %v617
        %v621 = vadd.f32 %v611, %v619
        %s622 = sld [smem:[#allocation3 + $0x27]]
        %v623 = vstv %s622
        %v624 = vmul.f32 %v308, %v623
        %626 = vrot.lane.b32.xlu0 %v624, 48
        %v627 = vpop.permute.xlu0 %626
        %v628 = vrot.slane %v627, 7
        %v629 = vsel %vm327, %v628, %v627
        %v631 = vadd.f32 %v621, %v629
        %s632 = sld [smem:[#allocation3 + $0x2e]]
        %v633 = vstv %s632
        %v634 = vmul.f32 %v308, %v633
        %636 = vrot.lane.b32.xlu0 %v634, 32
        %v637 = vpop.permute.xlu0 %636
        %v638 = vrot.slane %v637, 7
        %v639 = vsel %vm338, %v638, %v637
        %v641 = vadd.f32 %v631, %v639
        %vm642 = vcmp.ge.s32.totalorder %v270, 4294967295
        %vm643 = vcmp.lt.s32.totalorder %v270, 15
        %vm644 = vmand %vm642, %vm643
        %646 = vrot.lane.b32.xlu0 %v641, 47
        %v647 = vpop.permute.xlu0 %646
        %v648 = vrot.slane %v647, 1
        %vm649 = vcmask 384000
        %v650 = vsel %vm649, %v647, %v648
        %v652 = vsel %vm644, %v650, 0.0
        %v653 = vadd.f32 %v578, %v652
        %s654 = sld [smem:[#allocation3 + $0x5]]
        %v655 = vstv %s654
        %v656 = vmul.f32 %v271, %v655
        %s657 = sld [smem:[#allocation3 + $0xc]]
        %v658 = vstv %s657
        %v659 = vmul.f32 %v271, %v658
        %661 = vrot.lane.b32.xlu0 %v659, 112
        %v662 = vpop.permute.xlu0 %661
        %v663 = vrot.slane %v662, 1
        %v664 = vsel %vm282, %v662, %v663
        %v666 = vadd.f32 %v656, %v664
        %s667 = sld [smem:[#allocation3 + $0x13]]
        %v668 = vstv %s667
        %v669 = vmul.f32 %v271, %v668
        %671 = vrot.lane.b32.xlu0 %v669, 96
        %v672 = vpop.permute.xlu0 %671
        %v673 = vrot.slane %v672, 1
        %v674 = vsel %vm293, %v672, %v673
        %v676 = vadd.f32 %v666, %v674
        %s677 = sld [smem:[#allocation3 + $0x1a]]
        %v678 = vstv %s677
        %v679 = vmul.f32 %v308, %v678
        %681 = vrot.lane.b32.xlu0 %v679, 80
        %v682 = vpop.permute.xlu0 %681
        %v683 = vrot.slane %v682, 7
        %v684 = vsel %vm304, %v683, %v682
        %v686 = vadd.f32 %v676, %v684
        %s687 = sld [smem:[#allocation3 + $0x21]]
        %v688 = vstv %s687
        %v689 = vmul.f32 %v308, %v688
        %691 = vrot.lane.b32.xlu0 %v689, 64
        %v692 = vpop.permute.xlu0 %691
        %v693 = vrot.slane %v692, 7
        %v694 = vsel %vm316, %v693, %v692
        %v696 = vadd.f32 %v686, %v694
        %s697 = sld [smem:[#allocation3 + $0x28]]
        %v698 = vstv %s697
        %v699 = vmul.f32 %v308, %v698
        %701 = vrot.lane.b32.xlu0 %v699, 48
        %v702 = vpop.permute.xlu0 %701
        %v703 = vrot.slane %v702, 7
        %v704 = vsel %vm327, %v703, %v702
        %v706 = vadd.f32 %v696, %v704
        %s707 = sld [smem:[#allocation3 + $0x2f]]
        %v708 = vstv %s707
        %v709 = vmul.f32 %v308, %v708
        %711 = vrot.lane.b32.xlu0 %v709, 32
        %v712 = vpop.permute.xlu0 %711
        %v713 = vrot.slane %v712, 7
        %v714 = vsel %vm338, %v713, %v712
        %v716 = vadd.f32 %v706, %v714
        %vm717 = vcmp.ge.s32.totalorder %v270, 4294967294
        %vm718 = vcmp.lt.s32.totalorder %v270, 14
        %vm719 = vmand %vm717, %vm718
        %721 = vrot.lane.b32.xlu0 %v716, 46
        %v722 = vpop.permute.xlu0 %721
        %v723 = vrot.slane %v722, 1
        %vm724 = vcmask 375808
        %v725 = vsel %vm724, %v722, %v723
        %v727 = vsel %vm719, %v725, 0.0
        %v728 = vadd.f32 %v653, %v727
        %s729 = sld [smem:[#allocation3 + $0x6]]
        %v730 = vstv %s729
        %v731 = vmul.f32 %v271, %v730
        %s732 = sld [smem:[#allocation3 + $0xd]]
        %v733 = vstv %s732
        %v734 = vmul.f32 %v271, %v733
        %736 = vrot.lane.b32.xlu0 %v734, 112
        %v737 = vpop.permute.xlu0 %736
        %v738 = vrot.slane %v737, 1
        %v739 = vsel %vm282, %v737, %v738
        %v741 = vadd.f32 %v731, %v739
        %s742 = sld [smem:[#allocation3 + $0x14]]
        %v743 = vstv %s742
        %v744 = vmul.f32 %v271, %v743
        %746 = vrot.lane.b32.xlu0 %v744, 96
        %v747 = vpop.permute.xlu0 %746
        %v748 = vrot.slane %v747, 1
        %v749 = vsel %vm293, %v747, %v748
        %v751 = vadd.f32 %v741, %v749
        %s752 = sld [smem:[#allocation3 + $0x1b]]
        %v753 = vstv %s752
        %v754 = vmul.f32 %v308, %v753
        %756 = vrot.lane.b32.xlu0 %v754, 80
        %v757 = vpop.permute.xlu0 %756
        %v758 = vrot.slane %v757, 7
        %v759 = vsel %vm304, %v758, %v757
        %v761 = vadd.f32 %v751, %v759
        %s762 = sld [smem:[#allocation3 + $0x22]]
        %v763 = vstv %s762
        %v764 = vmul.f32 %v308, %v763
        %766 = vrot.lane.b32.xlu0 %v764, 64
        %v767 = vpop.permute.xlu0 %766
        %v768 = vrot.slane %v767, 7
        %v769 = vsel %vm316, %v768, %v767
        %v771 = vadd.f32 %v761, %v769
        %s772 = sld [smem:[#allocation3 + $0x29]]
        %v773 = vstv %s772
        %v774 = vmul.f32 %v308, %v773
        %776 = vrot.lane.b32.xlu0 %v774, 48
        %v777 = vpop.permute.xlu0 %776
        %v778 = vrot.slane %v777, 7
        %v779 = vsel %vm327, %v778, %v777
        %v781 = vadd.f32 %v771, %v779
        %s782 = sld [smem:[#allocation3 + $0x30]]
        %v783 = vstv %s782
        %v784 = vmul.f32 %v308, %v783
        %786 = vrot.lane.b32.xlu0 %v784, 32
        %v787 = vpop.permute.xlu0 %786
        %v788 = vrot.slane %v787, 7
        %v789 = vsel %vm338, %v788, %v787
        %v791 = vadd.f32 %v781, %v789
        %vm792 = vcmp.ge.s32.totalorder %v270, 4294967293
        %vm793 = vcmp.lt.s32.totalorder %v270, 13
        %vm794 = vmand %vm792, %vm793
        %796 = vrot.lane.b32.xlu0 %v791, 45
        %v797 = vpop.permute.xlu0 %796
        %v798 = vrot.slane %v797, 1
        %vm799 = vcmask 367616
        %v800 = vsel %vm799, %v797, %v798
        %v802 = vsel %vm794, %v800, 0.0
        %v803 = vadd.f32 %v728, %v802
        %v804 = vxor.u32 %v803, 2147483648
        %v805 = vmul.f32 %v804, 1.442695
        %v806 = vpow.pop %v805
        %v807 = vadd.f32 %v806, 1.0
        %v808 = vrcp.pop %v807
        %v809 = vmul.f32 1.0, %v808
        %v811 = vlaneseq
        %v812 = vshrl.u32 %v811, 7
        %v813 = vsub.s32 0, %v812
        %v814 = vrot.slane %v809, %v813
        %v815 = vlaneseq
        %v816 = vshrl.u32 %v815, 7
        %v817 = vsub.s32 1, %v816
        %v818 = vrot.slane %v809, %v817
        %v821 = vld [vmem:[%s201] sm:$0xff]
        %v823 = vcombine.high %v821, %v821
        %v825 = vmul.f32 %v814, %v821
        %v826 = vmul.f32 %v818, %v823
        %v829 = vcombine.low %v825, %v826
        %s831 = smul.addr %s199, 4
        %s832 = scalar_lea.vmem %s198, %s831 [#allocation8]
        %833 = vst [vmem:[%s832] sm:$0xff] %v829
        %s834 = sand.u32 %s97, 1
        %s835 = scalar_lea.sflag [#allocation5], %s834
        %s836 = sand.u32 %s97, 1
        %s837 = smul.addr %s836, 8
        %s838 = scalar_lea.vmem [#allocation8], %s837
        // Predicated region
        $region41: #{tpu_custom_call.1} parent=31 // pred_check
          %p839 = pneg %p107
        $region42: #{tpu_custom_call.1} parent=31 // pred_check_branch
          %841 = sbr.rel (%p839) target = $region44
        $region43: #{tpu_custom_call.1} parent=31 // pred_region
          %s843 = ssub.s32 128, 128
          %844 = vsyncadd %s835, %s843
          %s845 = smul.addr %s21, 2
          %s846 = smul.addr %s845, 64
          %s847 = scalar_lea.hbm %s3, %s846
          %s849 = sshll.u32 %s838, 4
          %s850 = int_to_ptr.vmem [resolvable:$true] %s849
          %852 = dma.vmem_to_hbm [thread:$0]  %s850, 128, %s847, %s835
        $region44: #{tpu_custom_call.1} parent=31 // pred_fallthru
          _
      $region32: #{tpu_custom_call.1} parent=5 // pred_fallthru
        _
      %p853 = scmp.le.s32.totalorder 2, %s16
      // Predicated region
      $region45: #{tpu_custom_call.1} parent=5 // pred_check
        %p854 = pneg %p853
      $region46: #{tpu_custom_call.1} parent=5 // pred_check_branch
        %856 = sbr.rel (%p854) target = $region48
      $region47: #{tpu_custom_call.1} parent=5 // pred_region
        %s857 = ssub.s32 %s16, 2
        // Predicated region
        $region49: #{tpu_custom_call.1} parent=47 // pred_check
          %p858 = pneg %p113
        $region50: #{tpu_custom_call.1} parent=47 // pred_check_branch
          %860 = sbr.rel (%p858) target = $region52
        $region51: #{tpu_custom_call.1} parent=47 // pred_region
          %s861 = sand.u32 %s98, 1
          %s862 = scalar_lea.sflag [#allocation5], %s861
          %s863 = sand.u32 %s98, 1
          %s864 = smul.addr %s863, 8
          %s865 = scalar_lea.vmem [#allocation8], %s864
          %866 = dma.done %s862, 128
        $region52: #{tpu_custom_call.1} parent=47 // pred_fallthru
          _
      $region48: #{tpu_custom_call.1} parent=5 // pred_fallthru
        _
    $region6: #{tpu_custom_call.1} parent=1 // loop_footer
      %s20 = sadd.s32 1, %s16
    $region7: #{tpu_custom_call.1} parent=1 // loop_footer_branch
      %15 = sbr.rel target = $region3
    $region8: #{tpu_custom_call.1} parent=1 // loop_exit
      _
    %867 = vsyncpa [#allocation4], 1
    %s868 = scalar_lea.sflag [#allocation4], 1
    %869 = vsyncpa %s868, 1
    %870 = vsyncpa [#allocation5], 1
    %s871 = scalar_lea.sflag [#allocation5], 1
    %872 = vsyncpa %s871, 1
    %873 = vsyncpa [#allocation6], 1
    %s874 = scalar_lea.sflag [#allocation6], 1
    %875 = vsyncpa %s874, 1

</llo_original>
